<compile_context>
chip_gen: v7x
topology: tpu7x:2x2x1
jax: 0.10.0
libtpu: 0.0.40
codegen_flags: <defaults>
</compile_context>

<pallas_src>
import jax
import jax.numpy as jnp
from jax.experimental import pallas as pl
from jax.experimental.pallas import tpu as pltpu

SUBLANE = 8


def classifier_kernel(x_ref, w1_ref, b1_ref, w2_ref, b2_ref, o_ref):
    # x_ref:  [TM, in_feat]        f32  (streamed per grid step)
    # w1_ref: [in_feat, hidden]    bf16 (VMEM-resident)
    # b1_ref: [1, hidden]          f32  (resident)
    # w2_ref: [hidden, num_labels] f32  (resident, unpadded)
    # b2_ref: [1, num_labels]      f32  (resident)
    # o_ref:  [TM, num_labels]     f32  (compact store; last dim == full dim)
    x = x_ref[...].astype(jnp.bfloat16)  # in-kernel cast: free under DMA slack
    h = jnp.dot(x, w1_ref[...], preferred_element_type=jnp.float32)
    h = jnp.tanh(h + b1_ref[...])
    y = jnp.dot(h, w2_ref[...], preferred_element_type=jnp.float32) + b2_ref[...]
    o_ref[...] = y.astype(o_ref.dtype)


def prepare_params(w1, b1, w2, b2):
    """One-time parameter prep (transpose + cast), hoisted out of the hot path.

    w1: torch layout [hidden, in_feat]; w2: [num_labels, hidden].
    """
    hidden, in_feat = w1.shape
    num_labels = w2.shape[0]
    w1_t = jnp.transpose(w1).astype(jnp.bfloat16)       # [in_feat, hidden]
    b1_2d = b1.reshape(1, hidden).astype(jnp.float32)    # [1, hidden]
    w2_t = jnp.transpose(w2).astype(jnp.float32)         # [hidden, num_labels]
    b2_2d = b2.reshape(1, num_labels).astype(jnp.float32)
    return w1_t, b1_2d, w2_t, b2_2d


def classifier_forward(x, w1_t, b1_2d, w2_t, b2_2d, tm=4096):
    """x: [..., in_feat]; params from prepare_params()."""
    in_feat, hidden = w1_t.shape
    num_labels = w2_t.shape[1]
    lead = x.shape[:-1]
    m = 1
    for d in lead:
        m *= d

    # f32 straight through — no wrapper cast pass; reshape is free (metadata only).
    x2d = x.reshape(m, in_feat).astype(jnp.float32)

    def round_up(a, b):
        return ((a + b - 1) // b) * b

    # Large row tile for DMA efficiency / step-overhead amortization, but clamp
    # so the grid has >= 2 steps when m allows it (v7x has 2 TCs sharing HBM).
    tm_eff = max(SUBLANE, min(tm, round_up(pl.cdiv(m, 2), SUBLANE)))
    grid = (pl.cdiv(m, tm_eff),)

    flops = 2 * m * (in_feat * hidden + hidden * num_labels)
    transcendentals = m * hidden
    bytes_accessed = (
        m * in_feat * 4                 # x (f32, streamed)
        + m * num_labels * 4            # output (f32, compact)
        + in_feat * hidden * 2          # w1 (bf16, resident)
        + hidden * num_labels * 4       # w2 (f32, resident)
        + (hidden + num_labels) * 4     # biases
    )

    out = pl.pallas_call(
        classifier_kernel,
        out_shape=jax.ShapeDtypeStruct((m, num_labels), jnp.float32),
        grid=grid,
        in_specs=[
            pl.BlockSpec((tm_eff, in_feat), lambda i: (i, 0)),
            pl.BlockSpec((in_feat, hidden), lambda i: (0, 0)),
            pl.BlockSpec((1, hidden), lambda i: (0, 0)),
            pl.BlockSpec((hidden, num_labels), lambda i: (0, 0)),
            pl.BlockSpec((1, num_labels), lambda i: (0, 0)),
        ],
        out_specs=pl.BlockSpec((tm_eff, num_labels), lambda i: (i, 0)),
        compiler_params=pltpu.CompilerParams(
            dimension_semantics=("parallel",),
            vmem_limit_bytes=32 * 1024 * 1024,
        ),
        cost_estimate=pl.CostEstimate(
            flops=flops,
            transcendentals=transcendentals,
            bytes_accessed=bytes_accessed,
        ),
    )(x2d, w1_t, b1_2d, w2_t, b2_2d)

    # No slice needed — output is already compact. Reshape is free.
    return out.reshape(*lead, num_labels)


def reference_forward(x, w1, b1, w2, b2):
    # Matches the kernel's bf16 quantization of the first-matmul operands so
    # the comparison isolates accumulation-order differences only.
    xq = x.astype(jnp.bfloat16).astype(jnp.float32)
    w1q = w1.astype(jnp.bfloat16).astype(jnp.float32)
    h = jnp.tanh(jnp.einsum("...i,hi->...h", xq, w1q) + b1)
    return jnp.einsum("...h,lh->...l", h, w2) + b2


if __name__ == "__main__":
    # Small shapes implied by the module: in_feat=32 -> hidden=16, num_labels=4.
    batch, seq, in_feat, num_labels = 2, 8, 32, 4
    hidden = in_feat // 2

    key = jax.random.PRNGKey(0)
    kx, kw1, kb1, kw2, kb2 = jax.random.split(key, 5)

    x = jax.random.normal(kx, (batch, seq, in_feat), dtype=jnp.float32)
    # Deterministic parameter init (torch-Linear-like uniform fan-in scaling).
    bound1 = 1.0 / (in_feat ** 0.5)
    bound2 = 1.0 / (hidden ** 0.5)
    w1 = jax.random.uniform(kw1, (hidden, in_feat), minval=-bound1, maxval=bound1)
    b1 = jax.random.uniform(kb1, (hidden,), minval=-bound1, maxval=bound1)
    w2 = jax.random.uniform(kw2, (num_labels, hidden), minval=-bound2, maxval=bound2)
    b2 = jax.random.uniform(kb2, (num_labels,), minval=-bound2, maxval=bound2)

    # One-time parameter prep (transpose + cast), outside hot path.
    w1_t, b1_2d, w2_t, b2_2d = prepare_params(w1, b1, w2, b2)

    out = classifier_forward(x, w1_t, b1_2d, w2_t, b2_2d)
    out = jax.block_until_ready(out)

    ref = reference_forward(x, w1, b1, w2, b2)
    assert out.shape == (batch, seq, num_labels), out.shape
    assert jnp.allclose(out, ref, atol=1e-3, rtol=1e-3), (
        "mismatch vs reference: max abs err = "
        f"{float(jnp.max(jnp.abs(out - ref)))}"
    )

    print("KERNEL_OK")
</pallas_src>

<mosaic_0001>
module attributes {stable_mosaic.version = 11 : i64} {
  func.func @classifier_kernel(%arg0: i32, %arg1: memref<8x32xf32, #tpu.memory_space<vmem>>, %arg2: memref<32x16xbf16, #tpu.memory_space<vmem>>, %arg3: memref<1x16xf32, #tpu.memory_space<vmem>>, %arg4: memref<16x4xf32, #tpu.memory_space<vmem>>, %arg5: memref<1x4xf32, #tpu.memory_space<vmem>>, %arg6: memref<8x4xf32, #tpu.memory_space<vmem>>) attributes {dimension_semantics = [#tpu.dimension_semantics<parallel>], iteration_bounds = array<i64: 2>, scalar_prefetch = 0 : i64, scratch_operands = 0 : i64, tpu.core_type = #tpu.core_type<tc>, window_params = [{transform_indices = @transform_0, window_bounds = array<i64: 8, 32>}, {pipeline_mode = #tpu.pipeline_mode<synchronous>, transform_indices = @transform_1, window_bounds = array<i64: 32, 16>}, {pipeline_mode = #tpu.pipeline_mode<synchronous>, transform_indices = @transform_2, window_bounds = array<i64: 1, 16>}, {pipeline_mode = #tpu.pipeline_mode<synchronous>, transform_indices = @transform_3, window_bounds = array<i64: 16, 4>}, {pipeline_mode = #tpu.pipeline_mode<synchronous>, transform_indices = @transform_4, window_bounds = array<i64: 1, 4>}, {transform_indices = @transform_5, window_bounds = array<i64: 8, 4>}]} {
    %c0 = arith.constant 0 : index
    %c0_0 = arith.constant 0 : index
    %0 = vector.load %arg1[%c0, %c0_0] : memref<8x32xf32, #tpu.memory_space<vmem>>, vector<8x32xf32>
    %1 = arith.truncf %0 : vector<8x32xf32> to vector<8x32xbf16>
    %c0_1 = arith.constant 0 : index
    %c0_2 = arith.constant 0 : index
    %2 = vector.load %arg2[%c0_1, %c0_2] : memref<32x16xbf16, #tpu.memory_space<vmem>>, vector<32x16xbf16>
    %cst = arith.constant dense<0.000000e+00> : vector<8x16xf32>
    %3 = tpu.matmul %1, %2, %cst {dimension_numbers = #tpu.dot_dimension_numbers<[1], [0], [0], [1], [0, 0, 1, 1], [], []>} : vector<8x32xbf16>, vector<32x16xbf16>, vector<8x16xf32> -> vector<8x16xf32>
    %c0_3 = arith.constant 0 : index
    %c0_4 = arith.constant 0 : index
    %4 = vector.load %arg3[%c0_3, %c0_4] : memref<1x16xf32, #tpu.memory_space<vmem>>, vector<1x16xf32>
    %5 = vector.broadcast %4 : vector<1x16xf32> to vector<8x16xf32>
    %6 = arith.addf %3, %5 : vector<8x16xf32>
    %7 = math.tanh %6 : vector<8x16xf32>
    %c0_5 = arith.constant 0 : index
    %c0_6 = arith.constant 0 : index
    %8 = vector.load %arg4[%c0_5, %c0_6] : memref<16x4xf32, #tpu.memory_space<vmem>>, vector<16x4xf32>
    %cst_7 = arith.constant dense<0.000000e+00> : vector<8x4xf32>
    %9 = tpu.matmul %7, %8, %cst_7 {dimension_numbers = #tpu.dot_dimension_numbers<[1], [0], [0], [1], [0, 0, 1, 1], [], []>} : vector<8x16xf32>, vector<16x4xf32>, vector<8x4xf32> -> vector<8x4xf32>
    %c0_8 = arith.constant 0 : index
    %c0_9 = arith.constant 0 : index
    %10 = vector.load %arg5[%c0_8, %c0_9] : memref<1x4xf32, #tpu.memory_space<vmem>>, vector<1x4xf32>
    %11 = vector.broadcast %10 : vector<1x4xf32> to vector<8x4xf32>
    %12 = arith.addf %9, %11 : vector<8x4xf32>
    %c0_10 = arith.constant 0 : index
    %c0_11 = arith.constant 0 : index
    %13 = vector.load %arg6[%c0_10, %c0_11] : memref<8x4xf32, #tpu.memory_space<vmem>>, vector<8x4xf32>
    tpu.vector_store %arg6[%c0_10, %c0_11], %12 {strides = array<i32>} : memref<8x4xf32, #tpu.memory_space<vmem>>, vector<8x4xf32>,
    return
  }
  func.func @transform_0(%arg0: i32) -> (i32, i32) {
    %c0_i32 = arith.constant 0 : i32
    %c0_i32_0 = arith.constant 0 : i32
    return %arg0, %c0_i32 : i32, i32
  }
  func.func @transform_1(%arg0: i32) -> (i32, i32) {
    %c0_i32 = arith.constant 0 : i32
    %c0_i32_0 = arith.constant 0 : i32
    %c0_i32_1 = arith.constant 0 : i32
    return %c0_i32, %c0_i32_0 : i32, i32
  }
  func.func @transform_2(%arg0: i32) -> (i32, i32) {
    %c0_i32 = arith.constant 0 : i32
    %c0_i32_0 = arith.constant 0 : i32
    %c0_i32_1 = arith.constant 0 : i32
    return %c0_i32, %c0_i32_0 : i32, i32
  }
  func.func @transform_3(%arg0: i32) -> (i32, i32) {
    %c0_i32 = arith.constant 0 : i32
    %c0_i32_0 = arith.constant 0 : i32
    %c0_i32_1 = arith.constant 0 : i32
    return %c0_i32, %c0_i32_0 : i32, i32
  }
  func.func @transform_4(%arg0: i32) -> (i32, i32) {
    %c0_i32 = arith.constant 0 : i32
    %c0_i32_0 = arith.constant 0 : i32
    %c0_i32_1 = arith.constant 0 : i32
    return %c0_i32, %c0_i32_0 : i32, i32
  }
  func.func @transform_5(%arg0: i32) -> (i32, i32) {
    %c0_i32 = arith.constant 0 : i32
    %c0_i32_0 = arith.constant 0 : i32
    return %arg0, %c0_i32 : i32, i32
  }
}

</mosaic_0001>

<llo_original>
// kernel: tpu_custom_call.1
$region0: #{tpu_custom_call.1}
  #allocation0 [shape = 'u32[]', space=smem, size = 0x4, offset = 0x4, fixed_abs, tag = 'smem constant byte address 0x4 - core index']
  #allocation1 [shape = 'u32[144,128]{1,0:T(1,128)}', space=vmem, size = 0x12000, scoped, tag = 'internal scratch']
  %s0 = inlined_call_operand.vmem [shape: f32[16,32], index: 0, kind: input, shape index: {}]
  %s1 = inlined_call_operand.vmem [shape: bf16[32,16], index: 1, kind: input, shape index: {}]
  %s2 = inlined_call_operand.vmem [shape: f32[1,16], index: 2, kind: input, shape index: {}]
  %s3 = inlined_call_operand.vmem [shape: f32[16,4], index: 3, kind: input, shape index: {}]
  %s4 = inlined_call_operand.vmem [shape: f32[1,4], index: 4, kind: input, shape index: {}]
  %s5 = inlined_call_operand.vmem [shape: f32[16,4], index: 5, kind: output, shape index: {}]
  %s6 = sld [smem:[#allocation0]]
  $region53: #{tpu_custom_call.1} parent=0
    _
  %s8 = ssub.s32 1, %s6
  %s9 = scalar_select 0, %s8, %s6
  loop: start=0, step=1, limit=4
  $region2: #{tpu_custom_call.1} parent=0 // loop_pre_header
    _
  $region3: #{tpu_custom_call.1} parent=0 // loop_header
    %s11 = sphi 0, %s15
    %p12 = scmp.ge.s32.totalorder %s11, 4
    %s21 = sphi 0, %s23
    %s24 = sphi 0, %s21
    %s25 = sphi 0, %s24
    %s41 = sphi 0, %s25
    %s45 = sphi 0, %s45
    %s47 = sphi 0, %s45
    %s48 = sphi 0, %s47
    %s62 = sphi 0, %s48
    %s66 = sphi 0, %s66
    %s68 = sphi 0, %s66
    %s69 = sphi 0, %s68
    %s83 = sphi 0, %s69
    %s87 = sphi 0, %s87
    %s89 = sphi 0, %s87
    %s90 = sphi 0, %s89
    %s104 = sphi 0, %s90
    %s108 = sphi 0, %s108
    %s110 = sphi 0, %s108
    %s111 = sphi 0, %s110
    %s125 = sphi 0, %s111
    %s131 = sphi 0, %s133
    %s134 = sphi 0, %s131
    %s135 = sphi 0, %s134
    %s151 = sphi 0, %s135
  $region4: #{tpu_custom_call.1} parent=0 // loop_header_branch
    %14 = sbr.rel (%p12) target = $region8
  $region5: #{tpu_custom_call.1} parent=0 // loop_body
    %s16 = ssub.s32 %s11, 1
    %s17 = ssub.s32 %s11, 2
    %s18 = sadd.s32 %s11, 1
    %s19 = ssub.s32 %s11, %s18
    %p20 = scmp.eq.s32.totalorder %s19, 0
    %s22 = sadd.s32 %s21, 1
    %s23 = scalar_select %p20, %s21, %s22
    %p26 = pneg %p20
    %p27 = scmp.eq.s32.totalorder %s11, 1
    %p28 = por %p26, %p27
    %p29 = scmp.ne.s32.totalorder %s21, %s24
    %p30 = scmp.eq.s32.totalorder %s11, 0
    %p31 = por %p29, %p30
    %p32 = scmp.ne.s32.totalorder %s21, %s24
    %p33 = scmp.eq.s32.totalorder %s16, 1
    %p34 = por %p32, %p33
    %p35 = scmp.ne.s32.totalorder %s24, %s25
    %p36 = scmp.eq.s32.totalorder %s16, 0
    %p37 = por %p35, %p36
    %p38 = scmp.ne.s32.totalorder %s24, %s25
    %p39 = scmp.eq.s32.totalorder %s17, 1
    %p40 = por %p38, %p39
    %p42 = scmp.ne.s32.totalorder %s25, %s41
    %p43 = scmp.eq.s32.totalorder %s17, 0
    %p44 = por %p42, %p43
    %s46 = sadd.s32 %s45, 1
    %p49 = scmp.eq.s32.totalorder %s11, 1
    %p50 = scmp.ne.s32.totalorder %s45, %s47
    %p51 = scmp.eq.s32.totalorder %s11, 0
    %p52 = por %p50, %p51
    %p53 = scmp.ne.s32.totalorder %s45, %s47
    %p54 = scmp.eq.s32.totalorder %s16, 1
    %p55 = por %p53, %p54
    %p56 = scmp.ne.s32.totalorder %s47, %s48
    %p57 = scmp.eq.s32.totalorder %s16, 0
    %p58 = por %p56, %p57
    %p59 = scmp.ne.s32.totalorder %s47, %s48
    %p60 = scmp.eq.s32.totalorder %s17, 1
    %p61 = por %p59, %p60
    %p63 = scmp.ne.s32.totalorder %s48, %s62
    %p64 = scmp.eq.s32.totalorder %s17, 0
    %p65 = por %p63, %p64
    %s67 = sadd.s32 %s66, 1
    %p70 = scmp.eq.s32.totalorder %s11, 1
    %p71 = scmp.ne.s32.totalorder %s66, %s68
    %p72 = scmp.eq.s32.totalorder %s11, 0
    %p73 = por %p71, %p72
    %p74 = scmp.ne.s32.totalorder %s66, %s68
    %p75 = scmp.eq.s32.totalorder %s16, 1
    %p76 = por %p74, %p75
    %p77 = scmp.ne.s32.totalorder %s68, %s69
    %p78 = scmp.eq.s32.totalorder %s16, 0
    %p79 = por %p77, %p78
    %p80 = scmp.ne.s32.totalorder %s68, %s69
    %p81 = scmp.eq.s32.totalorder %s17, 1
    %p82 = por %p80, %p81
    %p84 = scmp.ne.s32.totalorder %s69, %s83
    %p85 = scmp.eq.s32.totalorder %s17, 0
    %p86 = por %p84, %p85
    %s88 = sadd.s32 %s87, 1
    %p91 = scmp.eq.s32.totalorder %s11, 1
    %p92 = scmp.ne.s32.totalorder %s87, %s89
    %p93 = scmp.eq.s32.totalorder %s11, 0
    %p94 = por %p92, %p93
    %p95 = scmp.ne.s32.totalorder %s87, %s89
    %p96 = scmp.eq.s32.totalorder %s16, 1
    %p97 = por %p95, %p96
    %p98 = scmp.ne.s32.totalorder %s89, %s90
    %p99 = scmp.eq.s32.totalorder %s16, 0
    %p100 = por %p98, %p99
    %p101 = scmp.ne.s32.totalorder %s89, %s90
    %p102 = scmp.eq.s32.totalorder %s17, 1
    %p103 = por %p101, %p102
    %p105 = scmp.ne.s32.totalorder %s90, %s104
    %p106 = scmp.eq.s32.totalorder %s17, 0
    %p107 = por %p105, %p106
    %s109 = sadd.s32 %s108, 1
    %p112 = scmp.eq.s32.totalorder %s11, 1
    %p113 = scmp.ne.s32.totalorder %s108, %s110
    %p114 = scmp.eq.s32.totalorder %s11, 0
    %p115 = por %p113, %p114
    %p116 = scmp.ne.s32.totalorder %s108, %s110
    %p117 = scmp.eq.s32.totalorder %s16, 1
    %p118 = por %p116, %p117
    %p119 = scmp.ne.s32.totalorder %s110, %s111
    %p120 = scmp.eq.s32.totalorder %s16, 0
    %p121 = por %p119, %p120
    %p122 = scmp.ne.s32.totalorder %s110, %s111
    %p123 = scmp.eq.s32.totalorder %s17, 1
    %p124 = por %p122, %p123
    %p126 = scmp.ne.s32.totalorder %s111, %s125
    %p127 = scmp.eq.s32.totalorder %s17, 0
    %p128 = por %p126, %p127
    %s129 = ssub.s32 %s11, %s18
    %p130 = scmp.eq.s32.totalorder %s129, 0
    %s132 = sadd.s32 %s131, 1
    %s133 = scalar_select %p130, %s131, %s132
    %p136 = pneg %p130
    %p137 = scmp.eq.s32.totalorder %s11, 1
    %p138 = por %p136, %p137
    %p139 = scmp.ne.s32.totalorder %s131, %s134
    %p140 = scmp.eq.s32.totalorder %s11, 0
    %p141 = por %p139, %p140
    %p142 = scmp.ne.s32.totalorder %s131, %s134
    %p143 = scmp.eq.s32.totalorder %s16, 1
    %p144 = por %p142, %p143
    %p145 = scmp.ne.s32.totalorder %s134, %s135
    %p146 = scmp.eq.s32.totalorder %s16, 0
    %p147 = por %p145, %p146
    %p148 = scmp.ne.s32.totalorder %s134, %s135
    %p149 = scmp.eq.s32.totalorder %s17, 1
    %p150 = por %p148, %p149
    %p152 = scmp.ne.s32.totalorder %s135, %s151
    %p153 = scmp.eq.s32.totalorder %s17, 0
    %p154 = por %p152, %p153
    %p155 = scmp.le.s32.totalorder 1, %s11
    %p156 = scmp.lt.s32.totalorder %s11, 3
    %p157 = pnand %p155, %p156
    %p158 = pneg %p157
    // Predicated region
    $region9: #{tpu_custom_call.1} parent=5 // pred_check
      _
    $region10: #{tpu_custom_call.1} parent=5 // pred_check_branch
      %160 = sbr.rel (%p157) target = $region12
    $region11: #{tpu_custom_call.1} parent=5 // pred_region
      %s161 = ssub.s32 %s11, 1
      // Predicated region
      $region13: #{tpu_custom_call.1} parent=11 // pred_check
        %p162 = pneg %p58
      $region14: #{tpu_custom_call.1} parent=11 // pred_check_branch
        %164 = sbr.rel (%p162) target = $region16
      $region15: #{tpu_custom_call.1} parent=11 // pred_region
        _
      $region16: #{tpu_custom_call.1} parent=11 // pred_fallthru
        _
      // Predicated region
      $region17: #{tpu_custom_call.1} parent=11 // pred_check
        %p165 = pneg %p79
      $region18: #{tpu_custom_call.1} parent=11 // pred_check_branch
        %167 = sbr.rel (%p165) target = $region20
      $region19: #{tpu_custom_call.1} parent=11 // pred_region
        _
      $region20: #{tpu_custom_call.1} parent=11 // pred_fallthru
        _
      // Predicated region
      $region21: #{tpu_custom_call.1} parent=11 // pred_check
        %p168 = pneg %p100
      $region22: #{tpu_custom_call.1} parent=11 // pred_check_branch
        %170 = sbr.rel (%p168) target = $region24
      $region23: #{tpu_custom_call.1} parent=11 // pred_region
        _
      $region24: #{tpu_custom_call.1} parent=11 // pred_fallthru
        _
      // Predicated region
      $region25: #{tpu_custom_call.1} parent=11 // pred_check
        %p171 = pneg %p121
      $region26: #{tpu_custom_call.1} parent=11 // pred_check_branch
        %173 = sbr.rel (%p171) target = $region28
      $region27: #{tpu_custom_call.1} parent=11 // pred_region
        _
      $region28: #{tpu_custom_call.1} parent=11 // pred_fallthru
        _
    $region12: #{tpu_custom_call.1} parent=5 // pred_fallthru
      _
    %p174 = scmp.lt.s32.totalorder %s11, 2
    // Predicated region
    $region29: #{tpu_custom_call.1} parent=5 // pred_check
      %p175 = pneg %p174
    $region30: #{tpu_custom_call.1} parent=5 // pred_check_branch
      %177 = sbr.rel (%p175) target = $region32
    $region31: #{tpu_custom_call.1} parent=5 // pred_region
      // Predicated region
      $region33: #{tpu_custom_call.1} parent=31 // pred_check
        %p178 = pneg %p31
      $region34: #{tpu_custom_call.1} parent=31 // pred_check_branch
        %180 = sbr.rel (%p178) target = $region36
      $region35: #{tpu_custom_call.1} parent=31 // pred_region
        %p181 = scmp.lt.s32.totalorder %s11, 1
        %s182 = scalar_select %p181, %s11, 1
        %s183 = smul.addr %s182, 8
        %s184 = scalar_lea.vmem %s0, %s183
      $region36: #{tpu_custom_call.1} parent=31 // pred_fallthru
        _
    $region32: #{tpu_custom_call.1} parent=5 // pred_fallthru
      _
    %p185 = scmp.le.s32.totalorder 1, %s11
    %p186 = scmp.lt.s32.totalorder %s11, 3
    %p187 = pnand %p185, %p186
    %p188 = pneg %p187
    // Predicated region
    $region37: #{tpu_custom_call.1} parent=5 // pred_check
      _
    $region38: #{tpu_custom_call.1} parent=5 // pred_check_branch
      %190 = sbr.rel (%p187) target = $region40
    $region39: #{tpu_custom_call.1} parent=5 // pred_region
      %s191 = ssub.s32 %s11, 1
      %p192 = scmp.lt.s32.totalorder %s16, 1
      %s193 = scalar_select %p192, %s16, 1
      %s194 = smul.addr %s193, 8
      %s195 = scalar_lea.vmem %s0, %s194
      %p196 = pneg %p37
      %p197 = pneg %p34
      %p198 = pneg %p58
      %p199 = pneg %p55
      %p200 = pneg %p79
      %p201 = pneg %p76
      %p202 = pneg %p100
      %p203 = pneg %p97
      %p204 = pneg %p121
      %p205 = pneg %p118
      %p206 = pneg %p147
      %p207 = pneg %p144
      %p208 = scmp.lt.s32.totalorder %s16, 1
      %s209 = scalar_select %p208, %s16, 1
      %s210 = smul.addr %s209, 8
      %s211 = scalar_lea.vmem %s5, %s210
      %p212 = scmp.lt.s32.totalorder %s16, 1
      %s213 = scalar_select %p212, %s16, 1
      %s214 = smul.addr %s213, 8
      %s215 = scalar_lea.vmem %s0, %s214
      %p216 = scmp.lt.s32.totalorder %s16, 1
      %s217 = scalar_select %p216, %s16, 1
      %s218 = smul.addr %s217, 8
      %s219 = scalar_lea.vmem %s5, %s218
      %v221 = vld [vmem:[%s215] sm:$0xff]
      %v222 = vpack.c.bf16 %v221, %v221
      %v223 = vld [vmem:[%s1] sm:$0xf]
      %v224 = vld [vmem:[%s1 + $0x4] sm:$0xf]
      %v225 = vld [vmem:[%s1 + $0x8] sm:$0xf]
      %v226 = vld [vmem:[%s1 + $0xc] sm:$0xf]
      %v227 = vld [vmem:[%s2] sm:$0x1]
      %v229 = vlaneseq
      %v230 = vshrl.u32 %v229, 7
      %v231 = vsub.s32 0, %v230
      %v232 = vrot.slane %v227, %v231
      %v238 = vunpack.c.l.b16 %v223
      %v239 = vunpack.c.l.b16 %v224
      %v240 = vunpack.c.l.b16 %v225
      %v241 = vunpack.c.l.b16 %v226
      %v242 = vpack.c.b16 %v239, %v238
      %v243 = vpack.c.b16 %v241, %v240
      %vm246 = vcmask 261120
      %v248 = vsel %vm246, %v222, 0
      %250 = vmatprep.subr.bf16.mxu0 0
      %251 = vmatpush1.bf16.msra.mxu0 %v242
      %252 = vmatprep.subr.bf16.mxu0 0
      %253 = vmatpush1.bf16.msra.mxu0 %v243
      %254 = vmatprep.subr.bf16.mxu0 0
      %255 = vmatpush1.bf16.msra.mxu0 0
      %256 = vmatprep.subr.bf16.mxu0 0
      %257 = vmatpush1.bf16.msra.mxu0 0
      %258 = vmatprep.subr.bf16.mxu0 0
      %259 = vmatpush1.bf16.msra.mxu0 0
      %260 = vmatprep.subr.bf16.mxu0 0
      %261 = vmatpush1.bf16.msra.mxu0 0
      %262 = vmatprep.subr.bf16.mxu0 0
      %263 = vmatpush1.bf16.msra.mxu0 0
      %264 = vmatprep.subr.bf16.mxu0 0
      %265 = vmatpush1.bf16.msra.mxu0 0
      %266 = vmatprep.subr.bf16.mxu0 0
      %267 = vmatpush1.bf16.msra.mxu0 0
      %268 = vmatprep.subr.bf16.mxu0 0
      %269 = vmatpush1.bf16.msra.mxu0 0
      %270 = vmatprep.subr.bf16.mxu0 0
      %271 = vmatpush1.bf16.msra.mxu0 0
      %272 = vmatprep.subr.bf16.mxu0 0
      %273 = vmatpush1.bf16.msra.mxu0 0
      %274 = vmatprep.subr.bf16.mxu0 0
      %275 = vmatpush1.bf16.msra.mxu0 0
      %276 = vmatprep.subr.bf16.mxu0 0
      %277 = vmatpush1.bf16.msra.mxu0 0
      %278 = vmatprep.subr.bf16.mxu0 0
      %279 = vmatpush1.bf16.msra.mxu0 0
      %280 = vmatprep.subr.bf16.mxu0 0
      %281 = vmatpush1.bf16.msra.mxu0 0
      %282 = vmatprep.mubr.bf16.mxu0 0
      %283 = vmatmul.mubr.bf16.gmra.mrb[0].mxu0 %v248
      %v284 = vpop.f32.mrb[0].mxu0
      %v285 = vadd.f32 %v232, %v284
      %v286 = vpop.f32.mrb[0].mxu0
      %v287 = vpop.f32.mrb[0].mxu0
      %v288 = vpop.f32.mrb[0].mxu0
      %289 = vdwg.mxu0
      %v290 = vtanh.pop %v285
      %v291 = vld [vmem:[%s3] sm:$0xff]
      %v292 = vld [vmem:[%s3 + $0x8] sm:$0xff]
      %v293 = vld [vmem:[%s4] sm:$0x1]
      %v295 = vlaneseq
      %v296 = vshrl.u32 %v295, 7
      %v297 = vsub.s32 0, %v296
      %v298 = vrot.slane %v293, %v297
      %vm300 = vcmask 130048
      %v302 = vsel %vm300, %v290, 0
      %304 = vmatprep.subr.mxu0 0.0
      %305 = vmatpush1.msra.mxu0 %v291
      %306 = vmatprep.subr.mxu0 0.0
      %307 = vmatpush1.msra.mxu0 %v292
      %308 = vmatprep.subr.mxu0 0.0
      %309 = vmatpush1.msra.mxu0 0.0
      %310 = vmatprep.subr.mxu0 0.0
      %311 = vmatpush1.msra.mxu0 0.0
      %312 = vmatprep.subr.mxu0 0.0
      %313 = vmatpush1.msra.mxu0 0.0
      %314 = vmatprep.subr.mxu0 0.0
      %315 = vmatpush1.msra.mxu0 0.0
      %316 = vmatprep.subr.mxu0 0.0
      %317 = vmatpush1.msra.mxu0 0.0
      %318 = vmatprep.subr.mxu0 0.0
      %319 = vmatpush1.msra.mxu0 0.0
      %320 = vmatprep.subr.mxu0 0.0
      %321 = vmatpush1.msra.mxu0 0.0
      %322 = vmatprep.subr.mxu0 0.0
      %323 = vmatpush1.msra.mxu0 0.0
      %324 = vmatprep.subr.mxu0 0.0
      %325 = vmatpush1.msra.mxu0 0.0
      %326 = vmatprep.subr.mxu0 0.0
      %327 = vmatpush1.msra.mxu0 0.0
      %328 = vmatprep.subr.mxu0 0.0
      %329 = vmatpush1.msra.mxu0 0.0
      %330 = vmatprep.subr.mxu0 0.0
      %331 = vmatpush1.msra.mxu0 0.0
      %332 = vmatprep.subr.mxu0 0.0
      %333 = vmatpush1.msra.mxu0 0.0
      %334 = vmatprep.subr.mxu0 0.0
      %335 = vmatpush1.msra.mxu0 0.0
      %336 = vmatprep.subr.mxu0 0.0
      %337 = vmatpush1.msra.mxu0 0.0
      %338 = vmatprep.subr.mxu0 0.0
      %339 = vmatpush1.msra.mxu0 0.0
      %340 = vmatprep.subr.mxu0 0.0
      %341 = vmatpush1.msra.mxu0 0.0
      %342 = vmatprep.subr.mxu0 0.0
      %343 = vmatpush1.msra.mxu0 0.0
      %344 = vmatprep.subr.mxu0 0.0
      %345 = vmatpush1.msra.mxu0 0.0
      %346 = vmatprep.subr.mxu0 0.0
      %347 = vmatpush1.msra.mxu0 0.0
      %348 = vmatprep.subr.mxu0 0.0
      %349 = vmatpush1.msra.mxu0 0.0
      %350 = vmatprep.subr.mxu0 0.0
      %351 = vmatpush1.msra.mxu0 0.0
      %352 = vmatprep.subr.mxu0 0.0
      %353 = vmatpush1.msra.mxu0 0.0
      %354 = vmatprep.subr.mxu0 0.0
      %355 = vmatpush1.msra.mxu0 0.0
      %356 = vmatprep.subr.mxu0 0.0
      %357 = vmatpush1.msra.mxu0 0.0
      %358 = vmatprep.subr.mxu0 0.0
      %359 = vmatpush1.msra.mxu0 0.0
      %360 = vmatprep.subr.mxu0 0.0
      %361 = vmatpush1.msra.mxu0 0.0
      %362 = vmatprep.subr.mxu0 0.0
      %363 = vmatpush1.msra.mxu0 0.0
      %364 = vmatprep.subr.mxu0 0.0
      %365 = vmatpush1.msra.mxu0 0.0
      %366 = vmatprep.subr.mxu0 0.0
      %367 = vmatpush1.msra.mxu0 0.0
      %368 = vmatprep.mubr.f32.mxu0 0.0
      %369 = vmatmul.mubr.f32.gmra.mrb[0].mxu0 %v302
      %v370 = vpop.f32.mrb[0].mxu0
      %v371 = vadd.f32 %v298, %v370
      %v372 = vpop.f32.mrb[0].mxu0
      %373 = vdwg.mxu0
      %vm374 = vcmask 31744
      %375 = vst.msk [vmem:[%s219] sm:$0xff] %vm374, %v371
      %p376 = scmp.lt.s32.totalorder %s16, 1
      %s377 = scalar_select %p376, %s16, 1
      %s378 = smul.addr %s377, 8
      %s379 = scalar_lea.vmem %s5, %s378
      // Predicated region
      $region41: #{tpu_custom_call.1} parent=39 // pred_check
        %p380 = pneg %p144
      $region42: #{tpu_custom_call.1} parent=39 // pred_check_branch
        %382 = sbr.rel (%p380) target = $region44
      $region43: #{tpu_custom_call.1} parent=39 // pred_region
        _
      $region44: #{tpu_custom_call.1} parent=39 // pred_fallthru
        _
    $region40: #{tpu_custom_call.1} parent=5 // pred_fallthru
      _
    %p383 = scmp.le.s32.totalorder 2, %s11
    // Predicated region
    $region45: #{tpu_custom_call.1} parent=5 // pred_check
      %p384 = pneg %p383
    $region46: #{tpu_custom_call.1} parent=5 // pred_check_branch
      %386 = sbr.rel (%p384) target = $region48
    $region47: #{tpu_custom_call.1} parent=5 // pred_region
      %s387 = ssub.s32 %s11, 2
      // Predicated region
      $region49: #{tpu_custom_call.1} parent=47 // pred_check
        %p388 = pneg %p150
      $region50: #{tpu_custom_call.1} parent=47 // pred_check_branch
        %390 = sbr.rel (%p388) target = $region52
      $region51: #{tpu_custom_call.1} parent=47 // pred_region
        %p391 = scmp.lt.s32.totalorder %s17, 1
        %s392 = scalar_select %p391, %s17, 1
        %s393 = smul.addr %s392, 8
        %s394 = scalar_lea.vmem %s5, %s393
      $region52: #{tpu_custom_call.1} parent=47 // pred_fallthru
        _
    $region48: #{tpu_custom_call.1} parent=5 // pred_fallthru
      _
  $region6: #{tpu_custom_call.1} parent=0 // loop_footer
    %s15 = sadd.s32 1, %s11
  $region7: #{tpu_custom_call.1} parent=0 // loop_footer_branch
    %10 = sbr.rel target = $region3
  $region8: #{tpu_custom_call.1} parent=0 // loop_exit
    _

</llo_original>
